<compile_context>
chip_gen: v7x
topology: tpu7x:2x2x1
jax: 0.10.0
libtpu: 0.0.40
codegen_flags: <defaults>
</compile_context>

<pallas_src>
import functools

import numpy as np
import jax
import jax.numpy as jnp
from jax.experimental import pallas as pl
from jax.experimental.pallas import tpu as pltpu

LANE = 128
SUBLANE = 8
MAX_BLOCK_ROWS = 2048          # 2048*128*4B = 1 MiB f32 block (2 MiB dbl-buffered)


def _abs_pow(x, p):
    """|x|^p with a cheap VPU path for common powers (x is f32, p Python float)."""
    if p == 1.0:
        return jnp.abs(x)
    if p == 2.0:
        return x * x
    if float(p).is_integer() and 2 < p <= 16:
        ip = int(p)
        x2 = x * x
        out = x2
        for _ in range(ip // 2 - 1):
            out = out * x2
        if ip % 2:
            out = out * jnp.abs(x)
        return out
    # True non-integer P: fall back to the EUP exp/log path.
    return jnp.abs(x) ** p


def _fused_lp_kernel(tid_ref, x_ref, o_ref, acc_ref, *, p):
    """Accumulate per-tensor sum(|x|^p) into vreg-shaped (8,128) partials."""
    i = pl.program_id(0)

    @pl.when(i == 0)
    def _():
        acc_ref[...] = jnp.zeros_like(acc_ref)

    x = x_ref[...].astype(jnp.float32)          # compute in f32 (v5e-safe)
    v = _abs_pow(x, p)
    tr = v.shape[0]
    # (tr,128) -> (tr//8, 8, 128): zero-cost tile view; sum over leading batch
    # axis is pure cross-vreg VPU adds (no XLU reduce, no scalar carry chain).
    partial = v.reshape(tr // SUBLANE, SUBLANE, LANE).sum(axis=0)

    t = tid_ref[i]                               # which tensor this block feeds
    acc_ref[t] += partial

    @pl.when(i == pl.num_programs(0) - 1)
    def _():
        o_ref[...] = acc_ref[...]


def _fused_lp_pow_sums(tensors, p, max_block_rows=MAX_BLOCK_ROWS):
    """Return a (len(tensors),) f32 vector of sum(|x|^p) per tensor (p > 0)."""
    assert p > 0, "zero padding is only neutral for P > 0"
    num_t = len(tensors)
    if num_t == 0:
        return jnp.zeros((0,), jnp.float32)

    # Native storage dtype (bf16 grads stay bf16 in HBM; f32 math in-kernel).
    dtype = jnp.result_type(*[t.dtype for t in tensors])

    # Adaptive block size: no bigger than what the largest tensor needs,
    # multiple of 16 rows (covers the bf16 (16,128) min tile).
    max_elems = max(int(np.prod(t.shape)) for t in tensors)
    rows_needed = -(-max_elems // LANE)
    rows_needed = ((rows_needed + 15) // 16) * 16
    block_rows = max(16, min(max_block_rows, rows_needed))
    block_elems = block_rows * LANE

    segs = []
    tids = []
    for t_idx, t in enumerate(tensors):
        flat = jnp.asarray(t).reshape(-1).astype(dtype)
        n = flat.shape[0]
        nb = max(1, -(-n // block_elems))
        pad = nb * block_elems - n
        segs.append(flat)
        if pad:
            segs.append(jnp.zeros((pad,), dtype))   # zeros: |0|^p = 0 for p > 0
        tids += [t_idx] * nb

    slab = jnp.concatenate(segs).reshape(-1, LANE)   # (num_blocks*block_rows, 128)
    num_blocks = len(tids)
    tid_arr = jnp.asarray(np.asarray(tids, np.int32))

    partials = pl.pallas_call(
        functools.partial(_fused_lp_kernel, p=float(p)),
        out_shape=jax.ShapeDtypeStruct((num_t, SUBLANE, LANE), jnp.float32),
        grid_spec=pltpu.PrefetchScalarGridSpec(
            num_scalar_prefetch=1,
            grid=(num_blocks,),
            in_specs=[pl.BlockSpec((block_rows, LANE), lambda i, tid: (i, 0))],
            out_specs=pl.BlockSpec((num_t, SUBLANE, LANE),
                                   lambda i, tid: (0, 0, 0)),
            scratch_shapes=[pltpu.VMEM((num_t, SUBLANE, LANE), jnp.float32)],
        ),
        compiler_params=pltpu.CompilerParams(
            dimension_semantics=("arbitrary",)),
    )(tid_arr, slab)

    # Tiny (T,8,128) -> (T,) final reduce stays in plain JAX.
    return jnp.sum(partials, axis=(1, 2))


def lp_grad_forward(w_grads, a_grads, *, lmbda, P, only_weight_grads=False):
    """JAX/Pallas equivalent of LPGrad.forward."""
    w_grads = list(w_grads)
    a_grads = [] if only_weight_grads else list(a_grads)
    tensors = w_grads + a_grads
    if not tensors:
        return jnp.float32(0.0)

    sums = _fused_lp_pow_sums(tensors, P)            # (T,) sum(|x|^P) per tensor
    norms = sums ** (1.0 / float(P))                 # ||.||_P per tensor

    # Static per-tensor scaling: 1 for weight grads, B^(-1/P) for activations.
    scale = np.ones((len(tensors),), np.float32)
    for j, a in enumerate(a_grads):
        scale[len(w_grads) + j] = float(a.shape[0]) ** (-1.0 / float(P))

    reg = jnp.sum(norms * jnp.asarray(scale, jnp.float32))
    return jnp.float32(lmbda) * reg


def _reference(w_grads, a_grads, *, lmbda, P, only_weight_grads=False):
    reg = 0.0
    for w in w_grads:
        reg = reg + jnp.sum(jnp.abs(w.astype(jnp.float32)) ** P) ** (1.0 / P)
    if only_weight_grads:
        return lmbda * reg
    for a in a_grads:
        reg = reg + (jnp.sum(jnp.abs(a.astype(jnp.float32)) ** P) ** (1.0 / P)
                     ) * (a.shape[0] ** (-1.0 / P))
    return lmbda * reg


if __name__ == "__main__":
    lmbda = 0.01
    P = 2.0

    key = jax.random.PRNGKey(0)
    k = jax.random.split(key, 6)
    # weight gradients: conv NCHW-style (Cout, Cin, kH, kW), linear (out, in), bias
    w_grads = [
        jax.random.normal(k[0], (4, 4, 3, 3), dtype=jnp.float32),
        jax.random.normal(k[1], (32, 16), dtype=jnp.float32),
        jax.random.normal(k[2], (16,), dtype=jnp.float32),
    ]
    # activation gradients: NCHW feature-map grad and NC hidden grad
    a_grads = [
        jax.random.normal(k[3], (2, 4, 16, 16), dtype=jnp.float32),
        jax.random.normal(k[4], (2, 32), dtype=jnp.float32),
    ]

    out = lp_grad_forward(w_grads, a_grads, lmbda=lmbda, P=P)
    out = jax.block_until_ready(out)
    ref = _reference(w_grads, a_grads, lmbda=lmbda, P=P)
    assert jnp.allclose(out, ref, rtol=1e-5, atol=1e-5), (out, ref)

    # Also exercise the only_weight_grads path and a non-integer power.
    out_w = jax.block_until_ready(
        lp_grad_forward(w_grads, a_grads, lmbda=lmbda, P=P,
                        only_weight_grads=True))
    ref_w = _reference(w_grads, a_grads, lmbda=lmbda, P=P,
                       only_weight_grads=True)
    assert jnp.allclose(out_w, ref_w, rtol=1e-5, atol=1e-5), (out_w, ref_w)

    out3 = jax.block_until_ready(
        lp_grad_forward(w_grads, a_grads, lmbda=lmbda, P=1.5))
    ref3 = _reference(w_grads, a_grads, lmbda=lmbda, P=1.5)
    assert jnp.allclose(out3, ref3, rtol=1e-4, atol=1e-5), (out3, ref3)

    print("KERNEL_OK")
</pallas_src>

<mosaic_0001>
module attributes {stable_mosaic.version = 11 : i64} {
  func.func @_fused_lp_kernel(%arg0: i32, %arg1: memref<5xi32, #tpu.memory_space<smem>>, %arg2: memref<16x128xf32, #tpu.memory_space<vmem>>, %arg3: memref<5x8x128xf32, #tpu.memory_space<vmem>>, %arg4: memref<5x8x128xf32, #tpu.memory_space<vmem>>) attributes {dimension_semantics = [#tpu.dimension_semantics<arbitrary>], iteration_bounds = array<i64: 5>, scalar_prefetch = 1 : i64, scratch_operands = 1 : i64, tpu.core_type = #tpu.core_type<tc>, window_params = [{transform_indices = @transform_0, window_bounds = array<i64: 16, 128>}, {pipeline_mode = #tpu.pipeline_mode<synchronous>, transform_indices = @transform_1, window_bounds = array<i64: 5, 8, 128>}]} {
    %c0_i32 = arith.constant 0 : i32
    %0 = arith.cmpi eq, %arg0, %c0_i32 : i32
    %1 = arith.extui %0 : i1 to i32
    %c0_i32_0 = arith.constant 0 : i32
    %2 = arith.cmpi ne, %1, %c0_i32_0 : i32
    scf.if %2 {
      %cst_7 = arith.constant 0.000000e+00 : f32
      %20 = vector.broadcast %cst_7 : f32 to vector<5x8x128xf32>
      %c0_8 = arith.constant 0 : index
      %c0_9 = arith.constant 0 : index
      %c0_10 = arith.constant 0 : index
      %21 = vector.load %arg4[%c0_8, %c0_9, %c0_10] : memref<5x8x128xf32, #tpu.memory_space<vmem>>, vector<5x8x128xf32>
      tpu.vector_store %arg4[%c0_8, %c0_9, %c0_10], %20 {strides = array<i32>} : memref<5x8x128xf32, #tpu.memory_space<vmem>>, vector<5x8x128xf32>,
    } else {
    }
    %c0 = arith.constant 0 : index
    %c0_1 = arith.constant 0 : index
    %3 = vector.load %arg2[%c0, %c0_1] : memref<16x128xf32, #tpu.memory_space<vmem>>, vector<16x128xf32>
    %4 = arith.mulf %3, %3 : vector<16x128xf32>
    %5 = vector.shape_cast %4 : vector<16x128xf32> to vector<2x8x128xf32>
    %cst = arith.constant dense<0.000000e+00> : vector<8x128xf32>
    %6 = vector.multi_reduction <add>, %5, %cst [0] : vector<2x8x128xf32> to vector<8x128xf32>
    %7 = arith.index_cast %arg0 : i32 to index
    %8 = memref.load %arg1[%7] : memref<5xi32, #tpu.memory_space<smem>>
    %9 = arith.index_cast %8 : i32 to index
    %c0_2 = arith.constant 0 : index
    %c0_3 = arith.constant 0 : index
    %10 = vector.load %arg4[%9, %c0_2, %c0_3] : memref<5x8x128xf32, #tpu.memory_space<vmem>>, vector<1x8x128xf32>
    %11 = vector.shape_cast %10 : vector<1x8x128xf32> to vector<8x128xf32>
    %12 = arith.addf %11, %6 : vector<8x128xf32>
    %13 = arith.index_cast %8 : i32 to index
    %c0_4 = arith.constant 0 : index
    %c0_5 = arith.constant 0 : index
    %14 = vector.load %arg4[%13, %c0_4, %c0_5] : memref<5x8x128xf32, #tpu.memory_space<vmem>>, vector<1x8x128xf32>
    %15 = vector.shape_cast %14 : vector<1x8x128xf32> to vector<8x128xf32>
    %16 = vector.shape_cast %12 : vector<8x128xf32> to vector<1x8x128xf32>
    tpu.vector_store %arg4[%13, %c0_4, %c0_5], %16 {strides = array<i32>} : memref<5x8x128xf32, #tpu.memory_space<vmem>>, vector<1x8x128xf32>,
    %c4_i32 = arith.constant 4 : i32
    %17 = arith.cmpi eq, %arg0, %c4_i32 : i32
    %18 = arith.extui %17 : i1 to i32
    %c0_i32_6 = arith.constant 0 : i32
    %19 = arith.cmpi ne, %18, %c0_i32_6 : i32
    scf.if %19 {
      %c0_7 = arith.constant 0 : index
      %c0_8 = arith.constant 0 : index
      %c0_9 = arith.constant 0 : index
      %20 = vector.load %arg4[%c0_7, %c0_8, %c0_9] : memref<5x8x128xf32, #tpu.memory_space<vmem>>, vector<5x8x128xf32>
      %c0_10 = arith.constant 0 : index
      %c0_11 = arith.constant 0 : index
      %c0_12 = arith.constant 0 : index
      %21 = vector.load %arg3[%c0_10, %c0_11, %c0_12] : memref<5x8x128xf32, #tpu.memory_space<vmem>>, vector<5x8x128xf32>
      tpu.vector_store %arg3[%c0_10, %c0_11, %c0_12], %20 {strides = array<i32>} : memref<5x8x128xf32, #tpu.memory_space<vmem>>, vector<5x8x128xf32>,
    } else {
    }
    return
  }
  func.func @transform_0(%arg0: i32, %arg1: memref<5xi32, #tpu.memory_space<smem>>) -> (i32, i32) {
    %c0_i32 = arith.constant 0 : i32
    %c0_i32_0 = arith.constant 0 : i32
    return %arg0, %c0_i32 : i32, i32
  }
  func.func @transform_1(%arg0: i32, %arg1: memref<5xi32, #tpu.memory_space<smem>>) -> (i32, i32, i32) {
    %c0_i32 = arith.constant 0 : i32
    %c0_i32_0 = arith.constant 0 : i32
    %c0_i32_1 = arith.constant 0 : i32
    %c0_i32_2 = arith.constant 0 : i32
    return %c0_i32, %c0_i32_0, %c0_i32_1 : i32, i32, i32
  }
}

</mosaic_0001>

<llo_original>
// kernel: tpu_custom_call.1
$region0: #{tpu_custom_call.1}
  #allocation0 [shape = 'u32[]', space=smem, size = 0x4, offset = 0x4, fixed_abs, tag = 'smem constant byte address 0x4 - core index']
  #allocation1 [shape = 'u32[144,128]{1,0:T(1,128)}', space=vmem, size = 0x12000, scoped, tag = 'internal scratch']
  #allocation2 [shape = 'f32[5,8,128]{2,1,0:T(8,128)}', space=vmem, size = 0x5000, scoped, tag = 'scratch operand']
  #allocation3 [shape = 's32[1]{0}', space=sflag, size = 0x4, scoped, tag = 'scoped memory for tpu_custom_call.1']
  #allocation4 [shape = 'u8[512]{0}', space=smem, size = 0x200, scoped, tag = 'prefetched SMEM operand 0']
  %s0 = inlined_call_operand.hbm [shape: s32[5], index: 0, kind: input, shape index: {}]
  %s1 = inlined_call_operand.hbm [shape: f32[80,128], index: 1, kind: input, shape index: {}]
  %s2 = inlined_call_operand.hbm [shape: f32[5,8,128], index: 2, kind: output, shape index: {}]
  %s3 = sld [smem:[#allocation0]]
  $region49: #{tpu_custom_call.1} parent=0
    _
  %s5 = ssub.s32 1, %s3
  %s6 = scalar_select 0, %s5, %s3
  %8 = dma.hbm_to_smem %s0, 16, [#allocation4], [#allocation3]
  %9 = dma.done [#allocation3], 16
  %10 = sfence
  $region1: #{tpu_custom_call.1} parent=0
    #allocation5 [shape = 'u8[16384]{0}', space=vmem, size = 0x4000, scoped, tag = 'input window, operand 1']
    #allocation6 [shape = 's32[2]{0}', space=sflag, size = 0x8, scoped, tag = 'scoped memory for tpu_custom_call.1']
    #allocation7 [shape = 's32[2]{0}', space=sflag, size = 0x8, scoped, tag = 'scoped memory for tpu_custom_call.1']
    #allocation8 [shape = 'u8[20480]{0}', space=vmem, size = 0x5000, scoped, tag = 'output window, operand 0, single buffered']
    %11 = vsyncpa [#allocation6], 0
    %s12 = scalar_lea.sflag [#allocation6], 1
    %13 = vsyncpa %s12, 0
    %14 = vsyncpa [#allocation7], 0
    loop: start=0, step=1, limit=7
    $region2: #{tpu_custom_call.1} parent=1 // loop_pre_header
      _
    $region3: #{tpu_custom_call.1} parent=1 // loop_header
      %s16 = sphi 0, %s20
      %p17 = scmp.ge.s32.totalorder %s16, 7
      %s26 = sphi 0, %s28
      %s29 = sphi 0, %s26
      %s30 = sphi 0, %s29
      %s46 = sphi 0, %s30
      %s50 = sphi 0, %s50
      %s52 = sphi 0, %s50
      %s53 = sphi 0, %s52
      %s67 = sphi 0, %s53
    $region4: #{tpu_custom_call.1} parent=1 // loop_header_branch
      %19 = sbr.rel (%p17) target = $region8
    $region5: #{tpu_custom_call.1} parent=1 // loop_body
      %s21 = ssub.s32 %s16, 1
      %s22 = ssub.s32 %s16, 2
      %s23 = sadd.s32 %s16, 1
      %s24 = ssub.s32 %s16, %s23
      %p25 = scmp.eq.s32.totalorder %s24, 0
      %s27 = sadd.s32 %s26, 1
      %s28 = scalar_select %p25, %s26, %s27
      %p31 = pneg %p25
      %p32 = scmp.eq.s32.totalorder %s16, 4
      %p33 = por %p31, %p32
      %p34 = scmp.ne.s32.totalorder %s26, %s29
      %p35 = scmp.eq.s32.totalorder %s16, 0
      %p36 = por %p34, %p35
      %p37 = scmp.ne.s32.totalorder %s26, %s29
      %p38 = scmp.eq.s32.totalorder %s21, 4
      %p39 = por %p37, %p38
      %p40 = scmp.ne.s32.totalorder %s29, %s30
      %p41 = scmp.eq.s32.totalorder %s21, 0
      %p42 = por %p40, %p41
      %p43 = scmp.ne.s32.totalorder %s29, %s30
      %p44 = scmp.eq.s32.totalorder %s22, 4
      %p45 = por %p43, %p44
      %p47 = scmp.ne.s32.totalorder %s30, %s46
      %p48 = scmp.eq.s32.totalorder %s22, 0
      %p49 = por %p47, %p48
      %s51 = sadd.s32 %s50, 1
      %p54 = scmp.eq.s32.totalorder %s16, 4
      %p55 = scmp.ne.s32.totalorder %s50, %s52
      %p56 = scmp.eq.s32.totalorder %s16, 0
      %p57 = por %p55, %p56
      %p58 = scmp.ne.s32.totalorder %s50, %s52
      %p59 = scmp.eq.s32.totalorder %s21, 4
      %p60 = por %p58, %p59
      %p61 = scmp.ne.s32.totalorder %s52, %s53
      %p62 = scmp.eq.s32.totalorder %s21, 0
      %p63 = por %p61, %p62
      %p64 = scmp.ne.s32.totalorder %s52, %s53
      %p65 = scmp.eq.s32.totalorder %s22, 4
      %p66 = por %p64, %p65
      %p68 = scmp.ne.s32.totalorder %s53, %s67
      %p69 = scmp.eq.s32.totalorder %s22, 0
      %p70 = por %p68, %p69
      %p71 = scmp.le.s32.totalorder 1, %s16
      %p72 = scmp.lt.s32.totalorder %s16, 6
      %p73 = pnand %p71, %p72
      %p74 = pneg %p73
      // Predicated region
      $region9: #{tpu_custom_call.1} parent=5 // pred_check
        _
      $region10: #{tpu_custom_call.1} parent=5 // pred_check_branch
        %76 = sbr.rel (%p73) target = $region12
      $region11: #{tpu_custom_call.1} parent=5 // pred_region
        %s77 = ssub.s32 %s16, 1
      $region12: #{tpu_custom_call.1} parent=5 // pred_fallthru
        _
      %p78 = scmp.lt.s32.totalorder %s16, 5
      // Predicated region
      $region13: #{tpu_custom_call.1} parent=5 // pred_check
        %p79 = pneg %p78
      $region14: #{tpu_custom_call.1} parent=5 // pred_check_branch
        %81 = sbr.rel (%p79) target = $region16
      $region15: #{tpu_custom_call.1} parent=5 // pred_region
        // Predicated region
        $region17: #{tpu_custom_call.1} parent=15 // pred_check
          %p82 = pneg %p36
        $region18: #{tpu_custom_call.1} parent=15 // pred_check_branch
          %84 = sbr.rel (%p82) target = $region20
        $region19: #{tpu_custom_call.1} parent=15 // pred_region
          %s85 = sand.u32 %s26, 1
          %s86 = scalar_lea.sflag [#allocation6], %s85
          %s87 = sand.u32 %s26, 1
          %s88 = smul.addr %s87, 16
          %s89 = scalar_lea.vmem [#allocation5], %s88
          %s90 = smul.u32 2, %s16
          %s92 = ssub.s32 256, 256
          %93 = vsyncadd %s86, %s92
          %s94 = smul.addr %s90, 128
          %s95 = scalar_lea.hbm %s1, %s94
          %s96 = sshll.u32 %s89, 4
          %s97 = int_to_ptr.vmem [resolvable:$true] %s96
          %102 = dma.hbm_to_vmem [thread:$0]  %s95, 256, %s97, %s86, 128, 128, 8
        $region20: #{tpu_custom_call.1} parent=15 // pred_fallthru
          _
      $region16: #{tpu_custom_call.1} parent=5 // pred_fallthru
        _
      %p103 = scmp.le.s32.totalorder 1, %s16
      %p104 = scmp.lt.s32.totalorder %s16, 6
      %p105 = pnand %p103, %p104
      %p106 = pneg %p105
      // Predicated region
      $region21: #{tpu_custom_call.1} parent=5 // pred_check
        _
      $region22: #{tpu_custom_call.1} parent=5 // pred_check_branch
        %108 = sbr.rel (%p105) target = $region24
      $region23: #{tpu_custom_call.1} parent=5 // pred_region
        %s109 = ssub.s32 %s16, 1
        %s110 = sand.u32 %s29, 1
        %s111 = scalar_lea.sflag [#allocation6], %s110
        %s112 = sand.u32 %s29, 1
        %s113 = smul.addr %s112, 16
        %s114 = scalar_lea.vmem [#allocation5], %s113
        // Predicated region
        $region25: #{tpu_custom_call.1} parent=23 // pred_check
          %p115 = pneg %p42
        $region26: #{tpu_custom_call.1} parent=23 // pred_check_branch
          %117 = sbr.rel (%p115) target = $region28
        $region27: #{tpu_custom_call.1} parent=23 // pred_region
          %118 = dma.done %s111, 256
        $region28: #{tpu_custom_call.1} parent=23 // pred_fallthru
          _
        %s119 = sand.u32 %s29, 1
        %s120 = scalar_lea.sflag [#allocation6], %s119
        %s121 = sand.u32 %s29, 1
        %s122 = smul.addr %s121, 16
        %s123 = scalar_lea.vmem [#allocation5], %s122
        %p124 = pneg %p42
        %p125 = pneg %p39
        %p126 = pneg %p63
        %p127 = pneg %p60
        %s128 = smul.u32 2, %s21
        %p129 = scmp.eq.s32.totalorder %s21, 0
        // Predicated region
        $region29: #{tpu_custom_call.1} parent=23 // pred_check
          %p130 = pneg %p129
        $region30: #{tpu_custom_call.1} parent=23 // pred_check_branch
          %132 = sbr.rel (%p130) target = $region32
        $region31: #{tpu_custom_call.1} parent=23 // pred_region
          %133 = vst [vmem:[#allocation2] sm:$0xff] 0.0
          %134 = vst [vmem:[#allocation2 + $0x8] sm:$0xff] 0.0
          %135 = vst [vmem:[#allocation2 + $0x10] sm:$0xff] 0.0
          %136 = vst [vmem:[#allocation2 + $0x18] sm:$0xff] 0.0
          %137 = vst [vmem:[#allocation2 + $0x20] sm:$0xff] 0.0
        $region32: #{tpu_custom_call.1} parent=23 // pred_fallthru
          _
        %v138 = vld [vmem:[%s114] sm:$0xff]
        %v139 = vld [vmem:[%s114 + $0x8] sm:$0xff]
        %v140 = vmul.f32 %v138, %v138
        %v141 = vmul.f32 %v139, %v139
        %v142 = vadd.f32 %v140, %v141
        %s143 = sld [smem:[#allocation4 + %s21]]
        %s144 = smul.u32 %s143, 8
        %s145 = scalar_lea.vmem [#allocation2], %s144
        %v146 = vld [vmem:[%s145] sm:$0xff]
        %v147 = vadd.f32 %v146, %v142
        %148 = vst [vmem:[%s145] sm:$0xff] %v147
        %p149 = scmp.eq.s32.totalorder %s21, 4
        // Predicated region
        $region33: #{tpu_custom_call.1} parent=23 // pred_check
          %p150 = pneg %p149
        $region34: #{tpu_custom_call.1} parent=23 // pred_check_branch
          %152 = sbr.rel (%p150) target = $region36
        $region35: #{tpu_custom_call.1} parent=23 // pred_region
          %v153 = vld [vmem:[#allocation2] sm:$0xff]
          %v154 = vld [vmem:[#allocation2 + $0x8] sm:$0xff]
          %v155 = vld [vmem:[#allocation2 + $0x10] sm:$0xff]
          %v156 = vld [vmem:[#allocation2 + $0x18] sm:$0xff]
          %v157 = vld [vmem:[#allocation2 + $0x20] sm:$0xff]
          %158 = vst [vmem:[#allocation8] sm:$0xff] %v153
          %159 = vst [vmem:[#allocation8 + $0x8] sm:$0xff] %v154
          %160 = vst [vmem:[#allocation8 + $0x10] sm:$0xff] %v155
          %161 = vst [vmem:[#allocation8 + $0x18] sm:$0xff] %v156
          %162 = vst [vmem:[#allocation8 + $0x20] sm:$0xff] %v157
        $region36: #{tpu_custom_call.1} parent=23 // pred_fallthru
          _
        // Predicated region
        $region37: #{tpu_custom_call.1} parent=23 // pred_check
          %p163 = pneg %p60
        $region38: #{tpu_custom_call.1} parent=23 // pred_check_branch
          %165 = sbr.rel (%p163) target = $region40
        $region39: #{tpu_custom_call.1} parent=23 // pred_region
          %s167 = ssub.s32 640, 640
          %168 = vsyncadd [#allocation7], %s167
          %s169 = sshll.u32 [#allocation8], 4
          %s170 = int_to_ptr.vmem [resolvable:$true] %s169
          %175 = dma.vmem_to_hbm [thread:$0]  %s170, 640, %s2, [#allocation7], 128, 128, 8
        $region40: #{tpu_custom_call.1} parent=23 // pred_fallthru
          _
        // Predicated region
        $region41: #{tpu_custom_call.1} parent=23 // pred_check
          %p176 = pneg %p60
        $region42: #{tpu_custom_call.1} parent=23 // pred_check_branch
          %178 = sbr.rel (%p176) target = $region44
        $region43: #{tpu_custom_call.1} parent=23 // pred_region
          %179 = dma.done [#allocation7], 640
        $region44: #{tpu_custom_call.1} parent=23 // pred_fallthru
          _
      $region24: #{tpu_custom_call.1} parent=5 // pred_fallthru
        _
      %p180 = scmp.le.s32.totalorder 2, %s16
      // Predicated region
      $region45: #{tpu_custom_call.1} parent=5 // pred_check
        %p181 = pneg %p180
      $region46: #{tpu_custom_call.1} parent=5 // pred_check_branch
        %183 = sbr.rel (%p181) target = $region48
      $region47: #{tpu_custom_call.1} parent=5 // pred_region
        %s184 = ssub.s32 %s16, 2
      $region48: #{tpu_custom_call.1} parent=5 // pred_fallthru
        _
    $region6: #{tpu_custom_call.1} parent=1 // loop_footer
      %s20 = sadd.s32 1, %s16
    $region7: #{tpu_custom_call.1} parent=1 // loop_footer_branch
      %15 = sbr.rel target = $region3
    $region8: #{tpu_custom_call.1} parent=1 // loop_exit
      _
    %185 = vsyncpa [#allocation6], 1
    %s186 = scalar_lea.sflag [#allocation6], 1
    %187 = vsyncpa %s186, 1
    %188 = vsyncpa [#allocation7], 1
    %s189 = scalar_lea.sflag [#allocation7], 1
    %190 = vsyncpa %s189, 1

</llo_original>
